<compile_context>
chip_gen: v5e
topology: v5e:2x2
jax: 0.10.0
libtpu: 0.0.40
codegen_flags: <defaults>
</compile_context>

<pallas_src>
import functools

import jax
import jax.numpy as jnp
from jax.experimental import pallas as pl
from jax.experimental.pallas import tpu as pltpu


def _round_up(x, m):
    return ((x + m - 1) // m) * m


# ----------------------------- Pallas kernel ------------------------------ #

def _coupling_cascade_kernel(
    x_ref,        # [TN, P]   input features (batch tile)
    emb_ref,      # [TN, E]   embedded strain (batch tile)
    w1x_ref,      # [L, P, H] layer-1 weights, zero rows at transformed positions
    w1e_ref,      # [L, E, H] layer-1 weights acting on the strain embedding
    b1_ref,       # [L, 1, H]
    w2s_ref,      # [L, H, P] scale heads, zero columns at identity positions
    w2t_ref,      # [L, H, P] shift heads, zero columns at identity positions
    b2s_ref,      # [L, 1, P] zero at identity positions
    b2t_ref,      # [L, 1, P] zero at identity positions
    y_ref,        # [TN, P]   output features
    logdet_ref,   # [TN, 1]   total log|det J| over the cascade
    *,
    num_layers: int,
):
    x = x_ref[...].astype(jnp.float32)
    emb = emb_ref[...].astype(jnp.float32)
    logdet = jnp.zeros((x.shape[0], 1), jnp.float32)

    # Static Python loop over layers: x stays resident in VMEM/vregs, no HBM
    # round trip between layers.  L is small (a handful of coupling layers).
    for l in range(num_layers):
        # Conditioner layer 1.  w1x has zero rows at the transformed-feature
        # positions, so the full x tile feeds the MXU directly (no LHS slice).
        h = jnp.tanh(
            jnp.dot(x, w1x_ref[l], preferred_element_type=jnp.float32)
            + jnp.dot(emb, w1e_ref[l], preferred_element_type=jnp.float32)
            + b1_ref[l]
        )
        # Conditioner layer 2.  Heads are zero-padded to full feature width:
        # at identity positions s == tanh(0) == 0 and t == 0, so exp(s) == 1
        # and the full-width affine update leaves those features untouched.
        s = jnp.tanh(
            jnp.dot(h, w2s_ref[l], preferred_element_type=jnp.float32) + b2s_ref[l]
        )
        t = jnp.dot(h, w2t_ref[l], preferred_element_type=jnp.float32) + b2t_ref[l]

        x = x * jnp.exp(s) + t
        # Identity columns contribute exactly 0 to the sum -> logdet unchanged.
        logdet = logdet + jnp.sum(s, axis=-1, keepdims=True)

    # Single full-width store (no masked sliced stores) + single logdet store.
    y_ref[...] = x.astype(y_ref.dtype)
    logdet_ref[...] = logdet.astype(logdet_ref.dtype)


# ----------------------------- coupling layer ------------------------------ #

class AffineCouplingLayerPallas:
    """Single affine coupling layer (parameter container + pure-JAX reference)."""

    def __init__(self, num_features, strain_dim, hidden_dim=32, flip=False, key=None):
        self.num_features = num_features
        self.strain_dim = strain_dim
        self.hidden_dim = hidden_dim
        self.flip = bool(flip)

        T = num_features // 2                 # num_transformed
        I = num_features - T                  # num_identity
        self.num_identity, self.num_transformed = I, T
        if self.flip:
            self.id_start, self.tr_start = T, 0
        else:
            self.id_start, self.tr_start = 0, I
        self.id_size, self.tr_size = I, T

        if key is None:
            key = jax.random.PRNGKey(0)
        k1, k2, k3, k4 = jax.random.split(key, 4)
        P, E, H = num_features, strain_dim, hidden_dim

        # "Natural" (unpadded) parameters, used by the reference implementation.
        self.w1_id = jax.random.normal(k1, (I, H), jnp.float32) * 0.1
        self.w1e = jax.random.normal(k2, (E, H), jnp.float32) * 0.1
        self.b1 = jnp.zeros((1, H), jnp.float32)
        self.w2s_tr = jax.random.normal(k3, (H, T), jnp.float32) * 0.1
        self.w2t_tr = jax.random.normal(k4, (H, T), jnp.float32) * 0.1
        self.b2s_tr = jnp.zeros((1, T), jnp.float32)
        self.b2t_tr = jnp.zeros((1, T), jnp.float32)

        # Zero-padded parameters consumed by the fused Pallas kernel:
        #  - w1x: full feature width, zero rows at transformed positions.
        #  - w2s/w2t/b2s/b2t: full feature width, zero columns/biases at
        #    identity positions (so the full-width affine update is exact).
        self.w1x = jnp.zeros((P, H), jnp.float32).at[
            self.id_start:self.id_start + I, :].set(self.w1_id)
        self.w2s = jnp.zeros((H, P), jnp.float32).at[
            :, self.tr_start:self.tr_start + T].set(self.w2s_tr)
        self.w2t = jnp.zeros((H, P), jnp.float32).at[
            :, self.tr_start:self.tr_start + T].set(self.w2t_tr)
        self.b2s = jnp.zeros((1, P), jnp.float32).at[
            :, self.tr_start:self.tr_start + T].set(self.b2s_tr)
        self.b2t = jnp.zeros((1, P), jnp.float32).at[
            :, self.tr_start:self.tr_start + T].set(self.b2t_tr)

    # Pure-JAX reference (uses the unpadded parameters and explicit slicing).
    def ref(self, inputs, embedded_strain):
        x_id = inputs[:, self.id_start:self.id_start + self.id_size]
        x_tr = inputs[:, self.tr_start:self.tr_start + self.tr_size]
        h = jnp.tanh(x_id @ self.w1_id + embedded_strain @ self.w1e + self.b1)
        s = jnp.tanh(h @ self.w2s_tr + self.b2s_tr)
        t = h @ self.w2t_tr + self.b2t_tr
        y_tr = x_tr * jnp.exp(s) + t
        y = inputs.at[:, self.tr_start:self.tr_start + self.tr_size].set(y_tr)
        return y, jnp.sum(s, axis=-1)


# ----------------------------- coupling transform -------------------------- #

class CouplingTransformPallas:
    """Cascade of coupling layers, fused into a single Pallas TPU kernel."""

    # Rows-per-tile target.  At P=8/E=16/H=32 f32, a 16384-row tile moves ~2 MiB
    # per grid step and keeps pipeline buffers + intermediates well inside the
    # default scoped-VMEM limit on every generation (incl. v7x's 64 MiB VMEM).
    TN_TARGET = 16384
    # Above this many rows, force >=2 grid steps so v7x megacore can shard the
    # batch axis (neutral on single-TC v5e/v6e).
    MIN_SPLIT_ROWS = 2048

    def __init__(self, transform_layers):
        self._transforms = list(transform_layers)
        assert len(self._transforms) >= 1
        l0 = self._transforms[0]
        self.num_features = l0.num_features
        self.strain_dim = l0.strain_dim
        self.hidden_dim = l0.hidden_dim
        for layer in self._transforms:
            assert (layer.num_features, layer.strain_dim, layer.hidden_dim) == (
                self.num_features, self.strain_dim, self.hidden_dim)
        self.num_layers = len(self._transforms)

        # Stacked per-layer (zero-padded) parameters for the fused kernel.
        self.w1x = jnp.stack([l.w1x for l in self._transforms])   # [L, P, H]
        self.w1e = jnp.stack([l.w1e for l in self._transforms])   # [L, E, H]
        self.b1 = jnp.stack([l.b1 for l in self._transforms])     # [L, 1, H]
        self.w2s = jnp.stack([l.w2s for l in self._transforms])   # [L, H, P]
        self.w2t = jnp.stack([l.w2t for l in self._transforms])   # [L, H, P]
        self.b2s = jnp.stack([l.b2s for l in self._transforms])   # [L, 1, P]
        self.b2t = jnp.stack([l.b2t for l in self._transforms])   # [L, 1, P]

        self._forward_jit = jax.jit(self._forward_impl)

    def _forward_impl(self, inputs, embedded_strain):
        N, P = inputs.shape
        E = embedded_strain.shape[1]
        H, L = self.hidden_dim, self.num_layers
        assert P == self.num_features and E == self.strain_dim

        # Avoid a wrapper-side pad copy in the common multiple-of-8 batch case;
        # odd remainders pad <8 rows only (block rows must be a multiple of 8).
        n_rows = _round_up(N, 8)
        if n_rows != N:
            pad = ((0, n_rows - N), (0, 0))
            x_in = jnp.pad(inputs, pad)
            e_in = jnp.pad(embedded_strain, pad)
        else:
            x_in, e_in = inputs, embedded_strain

        tn = min(self.TN_TARGET, n_rows)
        if tn == n_rows and n_rows >= self.MIN_SPLIT_ROWS:
            # >=2 grid steps so the "parallel" batch axis shards across v7x TCs.
            tn = _round_up(pl.cdiv(n_rows, 2), 8)
        grid = (pl.cdiv(n_rows, tn),)

        kernel = functools.partial(_coupling_cascade_kernel, num_layers=L)

        def row_spec(shape):
            return pl.BlockSpec(shape, lambda i: (i, 0))

        def const_spec(shape):
            return pl.BlockSpec(shape, lambda i: (0, 0, 0))

        y, logdet = pl.pallas_call(
            kernel,
            grid=grid,
            in_specs=[
                row_spec((tn, P)),            # x (batch-tiled, pipelined)
                row_spec((tn, E)),            # embedded strain
                const_spec((L, P, H)),        # w1x (resident across grid steps)
                const_spec((L, E, H)),        # w1e
                const_spec((L, 1, H)),        # b1
                const_spec((L, H, P)),        # w2s
                const_spec((L, H, P)),        # w2t
                const_spec((L, 1, P)),        # b2s
                const_spec((L, 1, P)),        # b2t
            ],
            out_specs=[
                row_spec((tn, P)),
                row_spec((tn, 1)),
            ],
            out_shape=[
                jax.ShapeDtypeStruct((n_rows, P), jnp.float32),
                jax.ShapeDtypeStruct((n_rows, 1), jnp.float32),
            ],
            compiler_params=pltpu.CompilerParams(
                dimension_semantics=("parallel",),   # megacore sharding on v7x
            ),
        )(x_in, e_in, self.w1x, self.w1e, self.b1,
          self.w2s, self.w2t, self.b2s, self.b2t)

        return y[:N], logdet[:N, 0]

    def forward(self, inputs, embedded_strain):
        # TODO(synk): embedded_strain=None (unconditional) path not implemented.
        return self._forward_jit(inputs, embedded_strain)

    def forward_ref(self, inputs, embedded_strain):
        outputs = inputs
        total_logabsdet = jnp.zeros((inputs.shape[0],), inputs.dtype)
        for layer in self._transforms:
            outputs, logabsdet = layer.ref(outputs, embedded_strain)
            total_logabsdet = total_logabsdet + logabsdet
        return outputs, total_logabsdet

    # TODO(synk): inverse() pass (z -> theta) not implemented as a Pallas kernel.


# --------------------------------- main ------------------------------------ #

if __name__ == "__main__":
    N = 8    # batch
    P = 8    # num_features  -> num_identity = num_transformed = 4
    E = 16   # embedded strain dim
    H = 32   # conditioner hidden dim
    L = 3    # number of coupling layers in the cascade

    key = jax.random.PRNGKey(0)
    kx, ke, kp = jax.random.split(key, 3)
    inputs = jax.random.normal(kx, (N, P), jnp.float32)
    embedded_strain = jax.random.normal(ke, (N, E), jnp.float32)

    layer_keys = jax.random.split(kp, L)
    layers = [
        AffineCouplingLayerPallas(P, E, H, flip=bool(i % 2), key=layer_keys[i])
        for i in range(L)
    ]
    transform = CouplingTransformPallas(layers)

    y, logdet = transform.forward(inputs, embedded_strain)
    jax.block_until_ready((y, logdet))

    y_ref, logdet_ref = transform.forward_ref(inputs, embedded_strain)
    assert jnp.allclose(y, y_ref, atol=1e-5, rtol=1e-5), "output mismatch"
    assert jnp.allclose(logdet, logdet_ref, atol=1e-5, rtol=1e-5), "logdet mismatch"

    print("KERNEL_OK")
</pallas_src>

<mosaic_0001>
module attributes {stable_mosaic.version = 11 : i64} {
  func.func @_coupling_cascade_kernel(%arg0: i32, %arg1: memref<8x8xf32, #tpu.memory_space<vmem>>, %arg2: memref<8x16xf32, #tpu.memory_space<vmem>>, %arg3: memref<3x8x32xf32, #tpu.memory_space<vmem>>, %arg4: memref<3x16x32xf32, #tpu.memory_space<vmem>>, %arg5: memref<3x1x32xf32, #tpu.memory_space<vmem>>, %arg6: memref<3x32x8xf32, #tpu.memory_space<vmem>>, %arg7: memref<3x32x8xf32, #tpu.memory_space<vmem>>, %arg8: memref<3x1x8xf32, #tpu.memory_space<vmem>>, %arg9: memref<3x1x8xf32, #tpu.memory_space<vmem>>, %arg10: memref<8x8xf32, #tpu.memory_space<vmem>>, %arg11: memref<8x1xf32, #tpu.memory_space<vmem>>) attributes {dimension_semantics = [#tpu.dimension_semantics<parallel>], iteration_bounds = array<i64: 1>, scalar_prefetch = 0 : i64, scratch_operands = 0 : i64, tpu.core_type = #tpu.core_type<tc>, window_params = [{transform_indices = @transform_0, window_bounds = array<i64: 8, 8>}, {transform_indices = @transform_1, window_bounds = array<i64: 8, 16>}, {pipeline_mode = #tpu.pipeline_mode<synchronous>, transform_indices = @transform_2, window_bounds = array<i64: 3, 8, 32>}, {pipeline_mode = #tpu.pipeline_mode<synchronous>, transform_indices = @transform_3, window_bounds = array<i64: 3, 16, 32>}, {pipeline_mode = #tpu.pipeline_mode<synchronous>, transform_indices = @transform_4, window_bounds = array<i64: 3, 1, 32>}, {pipeline_mode = #tpu.pipeline_mode<synchronous>, transform_indices = @transform_5, window_bounds = array<i64: 3, 32, 8>}, {pipeline_mode = #tpu.pipeline_mode<synchronous>, transform_indices = @transform_6, window_bounds = array<i64: 3, 32, 8>}, {pipeline_mode = #tpu.pipeline_mode<synchronous>, transform_indices = @transform_7, window_bounds = array<i64: 3, 1, 8>}, {pipeline_mode = #tpu.pipeline_mode<synchronous>, transform_indices = @transform_8, window_bounds = array<i64: 3, 1, 8>}, {transform_indices = @transform_9, window_bounds = array<i64: 8, 8>}, {transform_indices = @transform_10, window_bounds = array<i64: 8, 1>}]} {
    %c0 = arith.constant 0 : index
    %c0_0 = arith.constant 0 : index
    %0 = vector.load %arg1[%c0, %c0_0] : memref<8x8xf32, #tpu.memory_space<vmem>>, vector<8x8xf32>
    %c0_1 = arith.constant 0 : index
    %c0_2 = arith.constant 0 : index
    %1 = vector.load %arg2[%c0_1, %c0_2] : memref<8x16xf32, #tpu.memory_space<vmem>>, vector<8x16xf32>
    %cst = arith.constant 0.000000e+00 : f32
    %2 = vector.broadcast %cst : f32 to vector<8x1xf32>
    %c0_3 = arith.constant 0 : index
    %c0_4 = arith.constant 0 : index
    %c0_5 = arith.constant 0 : index
    %3 = vector.load %arg3[%c0_3, %c0_4, %c0_5] : memref<3x8x32xf32, #tpu.memory_space<vmem>>, vector<1x8x32xf32>
    %4 = vector.shape_cast %3 : vector<1x8x32xf32> to vector<8x32xf32>
    %cst_6 = arith.constant dense<0.000000e+00> : vector<8x32xf32>
    %5 = tpu.matmul %0, %4, %cst_6 {dimension_numbers = #tpu.dot_dimension_numbers<[1], [0], [0], [1], [0, 0, 1, 1], [], []>} : vector<8x8xf32>, vector<8x32xf32>, vector<8x32xf32> -> vector<8x32xf32>
    %c0_7 = arith.constant 0 : index
    %c0_8 = arith.constant 0 : index
    %c0_9 = arith.constant 0 : index
    %6 = vector.load %arg4[%c0_7, %c0_8, %c0_9] : memref<3x16x32xf32, #tpu.memory_space<vmem>>, vector<1x16x32xf32>
    %7 = vector.shape_cast %6 : vector<1x16x32xf32> to vector<16x32xf32>
    %cst_10 = arith.constant dense<0.000000e+00> : vector<8x32xf32>
    %8 = tpu.matmul %1, %7, %cst_10 {dimension_numbers = #tpu.dot_dimension_numbers<[1], [0], [0], [1], [0, 0, 1, 1], [], []>} : vector<8x16xf32>, vector<16x32xf32>, vector<8x32xf32> -> vector<8x32xf32>
    %9 = arith.addf %5, %8 : vector<8x32xf32>
    %c0_11 = arith.constant 0 : index
    %c0_12 = arith.constant 0 : index
    %c0_13 = arith.constant 0 : index
    %10 = vector.load %arg5[%c0_11, %c0_12, %c0_13] : memref<3x1x32xf32, #tpu.memory_space<vmem>>, vector<1x1x32xf32>
    %11 = vector.shape_cast %10 : vector<1x1x32xf32> to vector<1x32xf32>
    %12 = vector.broadcast %11 : vector<1x32xf32> to vector<8x32xf32>
    %13 = arith.addf %9, %12 : vector<8x32xf32>
    %14 = math.tanh %13 : vector<8x32xf32>
    %c0_14 = arith.constant 0 : index
    %c0_15 = arith.constant 0 : index
    %c0_16 = arith.constant 0 : index
    %15 = vector.load %arg6[%c0_14, %c0_15, %c0_16] : memref<3x32x8xf32, #tpu.memory_space<vmem>>, vector<1x32x8xf32>
    %16 = vector.shape_cast %15 : vector<1x32x8xf32> to vector<32x8xf32>
    %cst_17 = arith.constant dense<0.000000e+00> : vector<8x8xf32>
    %17 = tpu.matmul %14, %16, %cst_17 {dimension_numbers = #tpu.dot_dimension_numbers<[1], [0], [0], [1], [0, 0, 1, 1], [], []>} : vector<8x32xf32>, vector<32x8xf32>, vector<8x8xf32> -> vector<8x8xf32>
    %c0_18 = arith.constant 0 : index
    %c0_19 = arith.constant 0 : index
    %c0_20 = arith.constant 0 : index
    %18 = vector.load %arg8[%c0_18, %c0_19, %c0_20] : memref<3x1x8xf32, #tpu.memory_space<vmem>>, vector<1x1x8xf32>
    %19 = vector.shape_cast %18 : vector<1x1x8xf32> to vector<1x8xf32>
    %20 = vector.broadcast %19 : vector<1x8xf32> to vector<8x8xf32>
    %21 = arith.addf %17, %20 : vector<8x8xf32>
    %22 = math.tanh %21 : vector<8x8xf32>
    %c0_21 = arith.constant 0 : index
    %c0_22 = arith.constant 0 : index
    %c0_23 = arith.constant 0 : index
    %23 = vector.load %arg7[%c0_21, %c0_22, %c0_23] : memref<3x32x8xf32, #tpu.memory_space<vmem>>, vector<1x32x8xf32>
    %24 = vector.shape_cast %23 : vector<1x32x8xf32> to vector<32x8xf32>
    %cst_24 = arith.constant dense<0.000000e+00> : vector<8x8xf32>
    %25 = tpu.matmul %14, %24, %cst_24 {dimension_numbers = #tpu.dot_dimension_numbers<[1], [0], [0], [1], [0, 0, 1, 1], [], []>} : vector<8x32xf32>, vector<32x8xf32>, vector<8x8xf32> -> vector<8x8xf32>
    %c0_25 = arith.constant 0 : index
    %c0_26 = arith.constant 0 : index
    %c0_27 = arith.constant 0 : index
    %26 = vector.load %arg9[%c0_25, %c0_26, %c0_27] : memref<3x1x8xf32, #tpu.memory_space<vmem>>, vector<1x1x8xf32>
    %27 = vector.shape_cast %26 : vector<1x1x8xf32> to vector<1x8xf32>
    %28 = vector.broadcast %27 : vector<1x8xf32> to vector<8x8xf32>
    %29 = arith.addf %25, %28 : vector<8x8xf32>
    %30 = math.exp %22 : vector<8x8xf32>
    %31 = arith.mulf %0, %30 : vector<8x8xf32>
    %32 = arith.addf %31, %29 : vector<8x8xf32>
    %cst_28 = arith.constant dense<0.000000e+00> : vector<8xf32>
    %33 = vector.multi_reduction <add>, %22, %cst_28 [1] : vector<8x8xf32> to vector<8xf32>
    %34 = vector.shape_cast %33 : vector<8xf32> to vector<8x1xf32>
    %35 = arith.addf %2, %34 : vector<8x1xf32>
    %c1 = arith.constant 1 : index
    %c0_29 = arith.constant 0 : index
    %c0_30 = arith.constant 0 : index
    %36 = vector.load %arg3[%c1, %c0_29, %c0_30] : memref<3x8x32xf32, #tpu.memory_space<vmem>>, vector<1x8x32xf32>
    %37 = vector.shape_cast %36 : vector<1x8x32xf32> to vector<8x32xf32>
    %cst_31 = arith.constant dense<0.000000e+00> : vector<8x32xf32>
    %38 = tpu.matmul %32, %37, %cst_31 {dimension_numbers = #tpu.dot_dimension_numbers<[1], [0], [0], [1], [0, 0, 1, 1], [], []>} : vector<8x8xf32>, vector<8x32xf32>, vector<8x32xf32> -> vector<8x32xf32>
    %c1_32 = arith.constant 1 : index
    %c0_33 = arith.constant 0 : index
    %c0_34 = arith.constant 0 : index
    %39 = vector.load %arg4[%c1_32, %c0_33, %c0_34] : memref<3x16x32xf32, #tpu.memory_space<vmem>>, vector<1x16x32xf32>
    %40 = vector.shape_cast %39 : vector<1x16x32xf32> to vector<16x32xf32>
    %cst_35 = arith.constant dense<0.000000e+00> : vector<8x32xf32>
    %41 = tpu.matmul %1, %40, %cst_35 {dimension_numbers = #tpu.dot_dimension_numbers<[1], [0], [0], [1], [0, 0, 1, 1], [], []>} : vector<8x16xf32>, vector<16x32xf32>, vector<8x32xf32> -> vector<8x32xf32>
    %42 = arith.addf %38, %41 : vector<8x32xf32>
    %c1_36 = arith.constant 1 : index
    %c0_37 = arith.constant 0 : index
    %c0_38 = arith.constant 0 : index
    %43 = vector.load %arg5[%c1_36, %c0_37, %c0_38] : memref<3x1x32xf32, #tpu.memory_space<vmem>>, vector<1x1x32xf32>
    %44 = vector.shape_cast %43 : vector<1x1x32xf32> to vector<1x32xf32>
    %45 = vector.broadcast %44 : vector<1x32xf32> to vector<8x32xf32>
    %46 = arith.addf %42, %45 : vector<8x32xf32>
    %47 = math.tanh %46 : vector<8x32xf32>
    %c1_39 = arith.constant 1 : index
    %c0_40 = arith.constant 0 : index
    %c0_41 = arith.constant 0 : index
    %48 = vector.load %arg6[%c1_39, %c0_40, %c0_41] : memref<3x32x8xf32, #tpu.memory_space<vmem>>, vector<1x32x8xf32>
    %49 = vector.shape_cast %48 : vector<1x32x8xf32> to vector<32x8xf32>
    %cst_42 = arith.constant dense<0.000000e+00> : vector<8x8xf32>
    %50 = tpu.matmul %47, %49, %cst_42 {dimension_numbers = #tpu.dot_dimension_numbers<[1], [0], [0], [1], [0, 0, 1, 1], [], []>} : vector<8x32xf32>, vector<32x8xf32>, vector<8x8xf32> -> vector<8x8xf32>
    %c1_43 = arith.constant 1 : index
    %c0_44 = arith.constant 0 : index
    %c0_45 = arith.constant 0 : index
    %51 = vector.load %arg8[%c1_43, %c0_44, %c0_45] : memref<3x1x8xf32, #tpu.memory_space<vmem>>, vector<1x1x8xf32>
    %52 = vector.shape_cast %51 : vector<1x1x8xf32> to vector<1x8xf32>
    %53 = vector.broadcast %52 : vector<1x8xf32> to vector<8x8xf32>
    %54 = arith.addf %50, %53 : vector<8x8xf32>
    %55 = math.tanh %54 : vector<8x8xf32>
    %c1_46 = arith.constant 1 : index
    %c0_47 = arith.constant 0 : index
    %c0_48 = arith.constant 0 : index
    %56 = vector.load %arg7[%c1_46, %c0_47, %c0_48] : memref<3x32x8xf32, #tpu.memory_space<vmem>>, vector<1x32x8xf32>
    %57 = vector.shape_cast %56 : vector<1x32x8xf32> to vector<32x8xf32>
    %cst_49 = arith.constant dense<0.000000e+00> : vector<8x8xf32>
    %58 = tpu.matmul %47, %57, %cst_49 {dimension_numbers = #tpu.dot_dimension_numbers<[1], [0], [0], [1], [0, 0, 1, 1], [], []>} : vector<8x32xf32>, vector<32x8xf32>, vector<8x8xf32> -> vector<8x8xf32>
    %c1_50 = arith.constant 1 : index
    %c0_51 = arith.constant 0 : index
    %c0_52 = arith.constant 0 : index
    %59 = vector.load %arg9[%c1_50, %c0_51, %c0_52] : memref<3x1x8xf32, #tpu.memory_space<vmem>>, vector<1x1x8xf32>
    %60 = vector.shape_cast %59 : vector<1x1x8xf32> to vector<1x8xf32>
    %61 = vector.broadcast %60 : vector<1x8xf32> to vector<8x8xf32>
    %62 = arith.addf %58, %61 : vector<8x8xf32>
    %63 = math.exp %55 : vector<8x8xf32>
    %64 = arith.mulf %32, %63 : vector<8x8xf32>
    %65 = arith.addf %64, %62 : vector<8x8xf32>
    %cst_53 = arith.constant dense<0.000000e+00> : vector<8xf32>
    %66 = vector.multi_reduction <add>, %55, %cst_53 [1] : vector<8x8xf32> to vector<8xf32>
    %67 = vector.shape_cast %66 : vector<8xf32> to vector<8x1xf32>
    %68 = arith.addf %35, %67 : vector<8x1xf32>
    %c2 = arith.constant 2 : index
    %c0_54 = arith.constant 0 : index
    %c0_55 = arith.constant 0 : index
    %69 = vector.load %arg3[%c2, %c0_54, %c0_55] : memref<3x8x32xf32, #tpu.memory_space<vmem>>, vector<1x8x32xf32>
    %70 = vector.shape_cast %69 : vector<1x8x32xf32> to vector<8x32xf32>
    %cst_56 = arith.constant dense<0.000000e+00> : vector<8x32xf32>
    %71 = tpu.matmul %65, %70, %cst_56 {dimension_numbers = #tpu.dot_dimension_numbers<[1], [0], [0], [1], [0, 0, 1, 1], [], []>} : vector<8x8xf32>, vector<8x32xf32>, vector<8x32xf32> -> vector<8x32xf32>
    %c2_57 = arith.constant 2 : index
    %c0_58 = arith.constant 0 : index
    %c0_59 = arith.constant 0 : index
    %72 = vector.load %arg4[%c2_57, %c0_58, %c0_59] : memref<3x16x32xf32, #tpu.memory_space<vmem>>, vector<1x16x32xf32>
    %73 = vector.shape_cast %72 : vector<1x16x32xf32> to vector<16x32xf32>
    %cst_60 = arith.constant dense<0.000000e+00> : vector<8x32xf32>
    %74 = tpu.matmul %1, %73, %cst_60 {dimension_numbers = #tpu.dot_dimension_numbers<[1], [0], [0], [1], [0, 0, 1, 1], [], []>} : vector<8x16xf32>, vector<16x32xf32>, vector<8x32xf32> -> vector<8x32xf32>
    %75 = arith.addf %71, %74 : vector<8x32xf32>
    %c2_61 = arith.constant 2 : index
    %c0_62 = arith.constant 0 : index
    %c0_63 = arith.constant 0 : index
    %76 = vector.load %arg5[%c2_61, %c0_62, %c0_63] : memref<3x1x32xf32, #tpu.memory_space<vmem>>, vector<1x1x32xf32>
    %77 = vector.shape_cast %76 : vector<1x1x32xf32> to vector<1x32xf32>
    %78 = vector.broadcast %77 : vector<1x32xf32> to vector<8x32xf32>
    %79 = arith.addf %75, %78 : vector<8x32xf32>
    %80 = math.tanh %79 : vector<8x32xf32>
    %c2_64 = arith.constant 2 : index
    %c0_65 = arith.constant 0 : index
    %c0_66 = arith.constant 0 : index
    %81 = vector.load %arg6[%c2_64, %c0_65, %c0_66] : memref<3x32x8xf32, #tpu.memory_space<vmem>>, vector<1x32x8xf32>
    %82 = vector.shape_cast %81 : vector<1x32x8xf32> to vector<32x8xf32>
    %cst_67 = arith.constant dense<0.000000e+00> : vector<8x8xf32>
    %83 = tpu.matmul %80, %82, %cst_67 {dimension_numbers = #tpu.dot_dimension_numbers<[1], [0], [0], [1], [0, 0, 1, 1], [], []>} : vector<8x32xf32>, vector<32x8xf32>, vector<8x8xf32> -> vector<8x8xf32>
    %c2_68 = arith.constant 2 : index
    %c0_69 = arith.constant 0 : index
    %c0_70 = arith.constant 0 : index
    %84 = vector.load %arg8[%c2_68, %c0_69, %c0_70] : memref<3x1x8xf32, #tpu.memory_space<vmem>>, vector<1x1x8xf32>
    %85 = vector.shape_cast %84 : vector<1x1x8xf32> to vector<1x8xf32>
    %86 = vector.broadcast %85 : vector<1x8xf32> to vector<8x8xf32>
    %87 = arith.addf %83, %86 : vector<8x8xf32>
    %88 = math.tanh %87 : vector<8x8xf32>
    %c2_71 = arith.constant 2 : index
    %c0_72 = arith.constant 0 : index
    %c0_73 = arith.constant 0 : index
    %89 = vector.load %arg7[%c2_71, %c0_72, %c0_73] : memref<3x32x8xf32, #tpu.memory_space<vmem>>, vector<1x32x8xf32>
    %90 = vector.shape_cast %89 : vector<1x32x8xf32> to vector<32x8xf32>
    %cst_74 = arith.constant dense<0.000000e+00> : vector<8x8xf32>
    %91 = tpu.matmul %80, %90, %cst_74 {dimension_numbers = #tpu.dot_dimension_numbers<[1], [0], [0], [1], [0, 0, 1, 1], [], []>} : vector<8x32xf32>, vector<32x8xf32>, vector<8x8xf32> -> vector<8x8xf32>
    %c2_75 = arith.constant 2 : index
    %c0_76 = arith.constant 0 : index
    %c0_77 = arith.constant 0 : index
    %92 = vector.load %arg9[%c2_75, %c0_76, %c0_77] : memref<3x1x8xf32, #tpu.memory_space<vmem>>, vector<1x1x8xf32>
    %93 = vector.shape_cast %92 : vector<1x1x8xf32> to vector<1x8xf32>
    %94 = vector.broadcast %93 : vector<1x8xf32> to vector<8x8xf32>
    %95 = arith.addf %91, %94 : vector<8x8xf32>
    %96 = math.exp %88 : vector<8x8xf32>
    %97 = arith.mulf %65, %96 : vector<8x8xf32>
    %98 = arith.addf %97, %95 : vector<8x8xf32>
    %cst_78 = arith.constant dense<0.000000e+00> : vector<8xf32>
    %99 = vector.multi_reduction <add>, %88, %cst_78 [1] : vector<8x8xf32> to vector<8xf32>
    %100 = vector.shape_cast %99 : vector<8xf32> to vector<8x1xf32>
    %101 = arith.addf %68, %100 : vector<8x1xf32>
    %c0_79 = arith.constant 0 : index
    %c0_80 = arith.constant 0 : index
    %102 = vector.load %arg10[%c0_79, %c0_80] : memref<8x8xf32, #tpu.memory_space<vmem>>, vector<8x8xf32>
    tpu.vector_store %arg10[%c0_79, %c0_80], %98 {strides = array<i32>} : memref<8x8xf32, #tpu.memory_space<vmem>>, vector<8x8xf32>,
    %c0_81 = arith.constant 0 : index
    %c0_82 = arith.constant 0 : index
    %103 = vector.load %arg11[%c0_81, %c0_82] : memref<8x1xf32, #tpu.memory_space<vmem>>, vector<8x1xf32>
    tpu.vector_store %arg11[%c0_81, %c0_82], %101 {strides = array<i32>} : memref<8x1xf32, #tpu.memory_space<vmem>>, vector<8x1xf32>,
    return
  }
  func.func @transform_0(%arg0: i32) -> (i32, i32) {
    %c0_i32 = arith.constant 0 : i32
    %c0_i32_0 = arith.constant 0 : i32
    return %arg0, %c0_i32 : i32, i32
  }
  func.func @transform_1(%arg0: i32) -> (i32, i32) {
    %c0_i32 = arith.constant 0 : i32
    %c0_i32_0 = arith.constant 0 : i32
    return %arg0, %c0_i32 : i32, i32
  }
  func.func @transform_2(%arg0: i32) -> (i32, i32, i32) {
    %c0_i32 = arith.constant 0 : i32
    %c0_i32_0 = arith.constant 0 : i32
    %c0_i32_1 = arith.constant 0 : i32
    %c0_i32_2 = arith.constant 0 : i32
    return %c0_i32, %c0_i32_0, %c0_i32_1 : i32, i32, i32
  }
  func.func @transform_3(%arg0: i32) -> (i32, i32, i32) {
    %c0_i32 = arith.constant 0 : i32
    %c0_i32_0 = arith.constant 0 : i32
    %c0_i32_1 = arith.constant 0 : i32
    %c0_i32_2 = arith.constant 0 : i32
    return %c0_i32, %c0_i32_0, %c0_i32_1 : i32, i32, i32
  }
  func.func @transform_4(%arg0: i32) -> (i32, i32, i32) {
    %c0_i32 = arith.constant 0 : i32
    %c0_i32_0 = arith.constant 0 : i32
    %c0_i32_1 = arith.constant 0 : i32
    %c0_i32_2 = arith.constant 0 : i32
    return %c0_i32, %c0_i32_0, %c0_i32_1 : i32, i32, i32
  }
  func.func @transform_5(%arg0: i32) -> (i32, i32, i32) {
    %c0_i32 = arith.constant 0 : i32
    %c0_i32_0 = arith.constant 0 : i32
    %c0_i32_1 = arith.constant 0 : i32
    %c0_i32_2 = arith.constant 0 : i32
    return %c0_i32, %c0_i32_0, %c0_i32_1 : i32, i32, i32
  }
  func.func @transform_6(%arg0: i32) -> (i32, i32, i32) {
    %c0_i32 = arith.constant 0 : i32
    %c0_i32_0 = arith.constant 0 : i32
    %c0_i32_1 = arith.constant 0 : i32
    %c0_i32_2 = arith.constant 0 : i32
    return %c0_i32, %c0_i32_0, %c0_i32_1 : i32, i32, i32
  }
  func.func @transform_7(%arg0: i32) -> (i32, i32, i32) {
    %c0_i32 = arith.constant 0 : i32
    %c0_i32_0 = arith.constant 0 : i32
    %c0_i32_1 = arith.constant 0 : i32
    %c0_i32_2 = arith.constant 0 : i32
    return %c0_i32, %c0_i32_0, %c0_i32_1 : i32, i32, i32
  }
  func.func @transform_8(%arg0: i32) -> (i32, i32, i32) {
    %c0_i32 = arith.constant 0 : i32
    %c0_i32_0 = arith.constant 0 : i32
    %c0_i32_1 = arith.constant 0 : i32
    %c0_i32_2 = arith.constant 0 : i32
    return %c0_i32, %c0_i32_0, %c0_i32_1 : i32, i32, i32
  }
  func.func @transform_9(%arg0: i32) -> (i32, i32) {
    %c0_i32 = arith.constant 0 : i32
    %c0_i32_0 = arith.constant 0 : i32
    return %arg0, %c0_i32 : i32, i32
  }
  func.func @transform_10(%arg0: i32) -> (i32, i32) {
    %c0_i32 = arith.constant 0 : i32
    %c0_i32_0 = arith.constant 0 : i32
    return %arg0, %c0_i32 : i32, i32
  }
}

</mosaic_0001>

<llo_original>
// kernel: _forward_impl.1
$region0: #{_forward_impl.1}
  #allocation0 [shape = 'u32[]', space=smem, size = 0x4, offset = 0x4, fixed_abs, tag = 'smem constant byte address 0x4 - core index']
  #allocation1 [shape = 'u32[72,128]{1,0:T(1,128)}', space=vmem, size = 0x9000, scoped, tag = 'internal scratch']
  %s0 = inlined_call_operand.hbm [shape: f32[8,8], index: 0, kind: input, shape index: {}]
  %s1 = inlined_call_operand.vmem [shape: f32[8,16], index: 1, kind: input, shape index: {}]
  %s2 = inlined_call_operand.hbm [shape: f32[3,8,32], index: 2, kind: input, shape index: {}]
  %s3 = inlined_call_operand.hbm [shape: f32[3,16,32], index: 3, kind: input, shape index: {}]
  %s4 = inlined_call_operand.vmem [shape: f32[3,1,32], index: 4, kind: input, shape index: {}]
  %s5 = inlined_call_operand.hbm [shape: f32[3,32,8], index: 5, kind: input, shape index: {}]
  %s6 = inlined_call_operand.hbm [shape: f32[3,32,8], index: 6, kind: input, shape index: {}]
  %s7 = inlined_call_operand.vmem [shape: f32[3,1,8], index: 7, kind: input, shape index: {}, may-alias: {7,8}]
  %s8 = inlined_call_operand.vmem [shape: f32[3,1,8], index: 8, kind: input, shape index: {}, may-alias: {7,8}]
  %s9 = inlined_call_operand.hbm [shape: f32[8,8], index: 9, kind: output, shape index: {0}]
  %s10 = inlined_call_operand.vmem [shape: f32[8,1], index: 10, kind: output, shape index: {1}]
  %11 = xla_tuple %s9, %s10
  %s12 = sld [smem:[#allocation0]]
  $region74: #{_forward_impl.1} parent=0
    _
  %s14 = ssub.s32 1, %s12
  %s15 = scalar_select 0, %s14, %s12
  $region1: #{_forward_impl.1} parent=0
    #allocation2 [shape = 'u8[4096]{0}', space=vmem, size = 0x1000, scoped, tag = 'input window, operand 0, single buffered']
    #allocation3 [shape = 's32[1]{0}', space=sflag, size = 0x4, scoped, tag = 'scoped memory for _forward_impl.1']
    #allocation4 [shape = 's32[1]{0}', space=sflag, size = 0x4, scoped, tag = 'scoped memory for _forward_impl.1']
    #allocation5 [shape = 'u8[12288]{0}', space=vmem, size = 0x3000, scoped, tag = 'input window, operand 2, single buffered']
    #allocation6 [shape = 's32[1]{0}', space=sflag, size = 0x4, scoped, tag = 'scoped memory for _forward_impl.1']
    #allocation7 [shape = 'u8[24576]{0}', space=vmem, size = 0x6000, scoped, tag = 'input window, operand 3, single buffered']
    #allocation8 [shape = 'u8[49152]{0}', space=vmem, size = 0xc000, scoped, tag = 'input window, operand 5, single buffered']
    #allocation9 [shape = 's32[1]{0}', space=sflag, size = 0x4, scoped, tag = 'scoped memory for _forward_impl.1']
    #allocation10 [shape = 'u8[49152]{0}', space=vmem, size = 0xc000, scoped, tag = 'input window, operand 6, single buffered']
    #allocation11 [shape = 'u8[4096]{0}', space=vmem, size = 0x1000, scoped, tag = 'output window, operand 0, single buffered']
    %16 = vsyncpa [#allocation3], 0
    %17 = vsyncpa [#allocation6], 0
    %18 = vsyncpa [#allocation9], 0
    %19 = vsyncpa [#allocation4], 0
    // Predicated region
    $region2: #{_forward_impl.1} parent=1 // pred_check
      _
    $region3: #{_forward_impl.1} parent=1 // pred_check_branch
      %21 = sbr.rel (0) target = $region5
    $region4: #{_forward_impl.1} parent=1 // pred_region
      %23 = vsyncadd [#allocation3], 0
      %s25 = sshll.u32 %s0, 4
      %s26 = int_to_ptr.hbm [resolvable:$true] %s25
      %s27 = sshll.u32 [#allocation2], 4
      %s28 = int_to_ptr.vmem [resolvable:$true] %s27
      %30 = dma.hbm_to_vmem [thread:$0]  %s26, 128, %s28, [#allocation3]
    $region5: #{_forward_impl.1} parent=1 // pred_fallthru
      _
    // Predicated region
    $region6: #{_forward_impl.1} parent=1 // pred_check
      _
    $region7: #{_forward_impl.1} parent=1 // pred_check_branch
      %32 = sbr.rel (0) target = $region9
    $region8: #{_forward_impl.1} parent=1 // pred_region
      _
    $region9: #{_forward_impl.1} parent=1 // pred_fallthru
      _
    // Predicated region
    $region10: #{_forward_impl.1} parent=1 // pred_check
      _
    $region11: #{_forward_impl.1} parent=1 // pred_check_branch
      %34 = sbr.rel (0) target = $region13
    $region12: #{_forward_impl.1} parent=1 // pred_region
      %36 = vsyncadd [#allocation6], 0
      %s37 = sshll.u32 %s2, 4
      %s38 = int_to_ptr.hbm [resolvable:$true] %s37
      %s39 = sshll.u32 [#allocation5], 4
      %s40 = int_to_ptr.vmem [resolvable:$true] %s39
      %45 = dma.hbm_to_vmem [thread:$0]  %s38, 384, %s40, [#allocation6], 128, 128, 8
    $region13: #{_forward_impl.1} parent=1 // pred_fallthru
      _
    // Predicated region
    $region14: #{_forward_impl.1} parent=1 // pred_check
      _
    $region15: #{_forward_impl.1} parent=1 // pred_check_branch
      %47 = sbr.rel (0) target = $region17
    $region16: #{_forward_impl.1} parent=1 // pred_region
      %49 = vsyncadd [#allocation6], 0
      %s50 = sshll.u32 %s3, 4
      %s51 = int_to_ptr.hbm [resolvable:$true] %s50
      %s52 = sshll.u32 [#allocation7], 4
      %s53 = int_to_ptr.vmem [resolvable:$true] %s52
      %58 = dma.hbm_to_vmem [thread:$0]  %s51, 768, %s53, [#allocation6], 128, 128, 8
    $region17: #{_forward_impl.1} parent=1 // pred_fallthru
      _
    // Predicated region
    $region18: #{_forward_impl.1} parent=1 // pred_check
      _
    $region19: #{_forward_impl.1} parent=1 // pred_check_branch
      %60 = sbr.rel (0) target = $region21
    $region20: #{_forward_impl.1} parent=1 // pred_region
      _
    $region21: #{_forward_impl.1} parent=1 // pred_fallthru
      _
    // Predicated region
    $region22: #{_forward_impl.1} parent=1 // pred_check
      _
    $region23: #{_forward_impl.1} parent=1 // pred_check_branch
      %62 = sbr.rel (0) target = $region25
    $region24: #{_forward_impl.1} parent=1 // pred_region
      %64 = vsyncadd [#allocation9], 0
      %s65 = sshll.u32 %s5, 4
      %s66 = int_to_ptr.hbm [resolvable:$true] %s65
      %s67 = sshll.u32 [#allocation8], 4
      %s68 = int_to_ptr.vmem [resolvable:$true] %s67
      %73 = dma.hbm_to_vmem [thread:$0]  %s66, 1536, %s68, [#allocation9], 128, 128, 8
    $region25: #{_forward_impl.1} parent=1 // pred_fallthru
      _
    // Predicated region
    $region26: #{_forward_impl.1} parent=1 // pred_check
      _
    $region27: #{_forward_impl.1} parent=1 // pred_check_branch
      %75 = sbr.rel (0) target = $region29
    $region28: #{_forward_impl.1} parent=1 // pred_region
      %77 = vsyncadd [#allocation9], 0
      %s78 = sshll.u32 %s6, 4
      %s79 = int_to_ptr.hbm [resolvable:$true] %s78
      %s80 = sshll.u32 [#allocation10], 4
      %s81 = int_to_ptr.vmem [resolvable:$true] %s80
      %86 = dma.hbm_to_vmem [thread:$0]  %s79, 1536, %s81, [#allocation9], 128, 128, 8
    $region29: #{_forward_impl.1} parent=1 // pred_fallthru
      _
    // Predicated region
    $region30: #{_forward_impl.1} parent=1 // pred_check
      _
    $region31: #{_forward_impl.1} parent=1 // pred_check_branch
      %88 = sbr.rel (0) target = $region33
    $region32: #{_forward_impl.1} parent=1 // pred_region
      _
    $region33: #{_forward_impl.1} parent=1 // pred_fallthru
      _
    // Predicated region
    $region34: #{_forward_impl.1} parent=1 // pred_check
      _
    $region35: #{_forward_impl.1} parent=1 // pred_check_branch
      %90 = sbr.rel (0) target = $region37
    $region36: #{_forward_impl.1} parent=1 // pred_region
      _
    $region37: #{_forward_impl.1} parent=1 // pred_fallthru
      _
    // Predicated region
    $region38: #{_forward_impl.1} parent=1 // pred_check
      _
    $region39: #{_forward_impl.1} parent=1 // pred_check_branch
      %92 = sbr.rel (0) target = $region41
    $region40: #{_forward_impl.1} parent=1 // pred_region
      %94 = dma.done [#allocation3], 128
    $region41: #{_forward_impl.1} parent=1 // pred_fallthru
      _
    // Predicated region
    $region42: #{_forward_impl.1} parent=1 // pred_check
      _
    $region43: #{_forward_impl.1} parent=1 // pred_check_branch
      %96 = sbr.rel (0) target = $region45
    $region44: #{_forward_impl.1} parent=1 // pred_region
      %98 = dma.done [#allocation6], 384
    $region45: #{_forward_impl.1} parent=1 // pred_fallthru
      _
    // Predicated region
    $region46: #{_forward_impl.1} parent=1 // pred_check
      _
    $region47: #{_forward_impl.1} parent=1 // pred_check_branch
      %100 = sbr.rel (0) target = $region49
    $region48: #{_forward_impl.1} parent=1 // pred_region
      %102 = dma.done [#allocation6], 768
    $region49: #{_forward_impl.1} parent=1 // pred_fallthru
      _
    // Predicated region
    $region50: #{_forward_impl.1} parent=1 // pred_check
      _
    $region51: #{_forward_impl.1} parent=1 // pred_check_branch
      %104 = sbr.rel (0) target = $region53
    $region52: #{_forward_impl.1} parent=1 // pred_region
      %106 = dma.done [#allocation9], 1536
    $region53: #{_forward_impl.1} parent=1 // pred_fallthru
      _
    // Predicated region
    $region54: #{_forward_impl.1} parent=1 // pred_check
      _
    $region55: #{_forward_impl.1} parent=1 // pred_check_branch
      %108 = sbr.rel (0) target = $region57
    $region56: #{_forward_impl.1} parent=1 // pred_region
      %110 = dma.done [#allocation9], 1536
    $region57: #{_forward_impl.1} parent=1 // pred_fallthru
      _
    %v111 = vld [vmem:[#allocation2] sm:$0xff]
    %v112 = vld [vmem:[%s1] sm:$0xff]
    %v113 = vld [vmem:[#allocation5] sm:$0xff]
    %v114 = vld [vmem:[#allocation7] sm:$0xff]
    %v115 = vld [vmem:[#allocation7 + $0x8] sm:$0xff]
    %vm116 = vcmask 130048
    %v118 = vsel %vm116, %v112, 0
    %120 = vmatpush.msra.mxu0 0.0
    %121 = vmatpush.msra.mxu0 0.0
    %122 = vmatpush.msra.mxu0 0.0
    %123 = vmatpush.msra.mxu0 0.0
    %124 = vmatpush.msra.mxu0 0.0
    %125 = vmatpush.msra.mxu0 0.0
    %126 = vmatpush.msra.mxu0 0.0
    %127 = vmatpush.msra.mxu0 0.0
    %128 = vmatpush.msra.mxu0 0.0
    %129 = vmatpush.msra.mxu0 0.0
    %130 = vmatpush.msra.mxu0 0.0
    %131 = vmatpush.msra.mxu0 0.0
    %132 = vmatpush.msra.mxu0 0.0
    %133 = vmatpush.msra.mxu0 0.0
    %134 = vmatpush.msra.mxu0 %v115
    %135 = vmatpush.msra.mxu0 %v114
    %136 = vmatmul.f32.gmra.mxu0 %v118
    %v137 = vpop.f32.mrf.mxu0
    %v138 = vadd.f32 0.0, %v137
    %139 = vdwg.mxu0
    %vm140 = vcmask 64512
    %v142 = vsel %vm140, %v111, 0
    %144 = vmatpush.msra.mxu0 0.0
    %145 = vmatpush.msra.mxu0 0.0
    %146 = vmatpush.msra.mxu0 0.0
    %147 = vmatpush.msra.mxu0 0.0
    %148 = vmatpush.msra.mxu0 0.0
    %149 = vmatpush.msra.mxu0 0.0
    %150 = vmatpush.msra.mxu0 0.0
    %151 = vmatpush.msra.mxu0 0.0
    %152 = vmatpush.msra.mxu0 0.0
    %153 = vmatpush.msra.mxu0 0.0
    %154 = vmatpush.msra.mxu0 0.0
    %155 = vmatpush.msra.mxu0 0.0
    %156 = vmatpush.msra.mxu0 0.0
    %157 = vmatpush.msra.mxu0 0.0
    %158 = vmatpush.msra.mxu0 0.0
    %159 = vmatpush.msra.mxu0 %v113
    %160 = vmatmul.f32.gmra.mxu0 %v142
    %v161 = vpop.f32.mrf.mxu0
    %v162 = vadd.f32 %v138, %v161
    %163 = vdwg.mxu0
    %v164 = vld [vmem:[%s4] sm:$0x1]
    %v166 = vperm.slane %v164, 0
    %v168 = vadd.f32 %v162, %v166
    %v169 = vtanh.pop %v168
    %v170 = vld [vmem:[#allocation8] sm:$0xff]
    %v171 = vld [vmem:[#allocation8 + $0x8] sm:$0xff]
    %v172 = vld [vmem:[#allocation8 + $0x10] sm:$0xff]
    %v173 = vld [vmem:[#allocation8 + $0x18] sm:$0xff]
    %v174 = vld [vmem:[%s7] sm:$0x1]
    %v176 = vperm.slane %v174, 0
    %vm178 = vcmask 261120
    %v180 = vsel %vm178, %v169, 0
    %182 = vmatpush.msra.mxu0 0.0
    %183 = vmatpush.msra.mxu0 0.0
    %184 = vmatpush.msra.mxu0 0.0
    %185 = vmatpush.msra.mxu0 0.0
    %186 = vmatpush.msra.mxu0 0.0
    %187 = vmatpush.msra.mxu0 0.0
    %188 = vmatpush.msra.mxu0 0.0
    %189 = vmatpush.msra.mxu0 0.0
    %190 = vmatpush.msra.mxu0 0.0
    %191 = vmatpush.msra.mxu0 0.0
    %192 = vmatpush.msra.mxu0 0.0
    %193 = vmatpush.msra.mxu0 0.0
    %194 = vmatpush.msra.mxu0 %v173
    %195 = vmatpush.msra.mxu0 %v172
    %196 = vmatpush.msra.mxu0 %v171
    %197 = vmatpush.msra.mxu0 %v170
    %198 = vmatmul.f32.gmra.mxu0 %v180
    %v199 = vpop.f32.mrf.mxu0
    %v200 = vadd.f32 %v176, %v199
    %201 = vdwg.mxu0
    %v202 = vtanh.pop %v200
    %v203 = vld [vmem:[#allocation10] sm:$0xff]
    %v204 = vld [vmem:[#allocation10 + $0x8] sm:$0xff]
    %v205 = vld [vmem:[#allocation10 + $0x10] sm:$0xff]
    %v206 = vld [vmem:[#allocation10 + $0x18] sm:$0xff]
    %v207 = vld [vmem:[%s8] sm:$0x1]
    %v209 = vperm.slane %v207, 0
    %211 = vmatpush.msra.mxu0 0.0
    %212 = vmatpush.msra.mxu0 0.0
    %213 = vmatpush.msra.mxu0 0.0
    %214 = vmatpush.msra.mxu0 0.0
    %215 = vmatpush.msra.mxu0 0.0
    %216 = vmatpush.msra.mxu0 0.0
    %217 = vmatpush.msra.mxu0 0.0
    %218 = vmatpush.msra.mxu0 0.0
    %219 = vmatpush.msra.mxu0 0.0
    %220 = vmatpush.msra.mxu0 0.0
    %221 = vmatpush.msra.mxu0 0.0
    %222 = vmatpush.msra.mxu0 0.0
    %223 = vmatpush.msra.mxu0 %v206
    %224 = vmatpush.msra.mxu0 %v205
    %225 = vmatpush.msra.mxu0 %v204
    %226 = vmatpush.msra.mxu0 %v203
    %227 = vmatmul.f32.gmra.mxu0 %v180
    %v228 = vpop.f32.mrf.mxu0
    %v229 = vadd.f32 %v209, %v228
    %230 = vdwg.mxu0
    %v231 = vmul.f32 %v202, 1.442695
    %v232 = vpow.pop %v231
    %v233 = vmul.f32 %v111, %v232
    %v234 = vadd.f32 %v233, %v229
    %v235 = vsel %vm140, %v202, 0.0
    %236 = vadd.xlane.f32.xlu0 %v235
    %v237 = vpop.xlane.xlu0 %236
    %v238 = vadd.f32 %v237, 0.0
    %s239 = scalar_lea.vmem [#allocation5], 8
    %v240 = vld [vmem:[%s239] sm:$0xff]
    %s241 = scalar_lea.vmem [#allocation7], 16
    %v242 = vld [vmem:[%s241] sm:$0xff]
    %v243 = vld [vmem:[%s241 + $0x8] sm:$0xff]
    %244 = vmatpush.msra.mxu0 0.0
    %245 = vmatpush.msra.mxu0 0.0
    %246 = vmatpush.msra.mxu0 0.0
    %247 = vmatpush.msra.mxu0 0.0
    %248 = vmatpush.msra.mxu0 0.0
    %249 = vmatpush.msra.mxu0 0.0
    %250 = vmatpush.msra.mxu0 0.0
    %251 = vmatpush.msra.mxu0 0.0
    %252 = vmatpush.msra.mxu0 0.0
    %253 = vmatpush.msra.mxu0 0.0
    %254 = vmatpush.msra.mxu0 0.0
    %255 = vmatpush.msra.mxu0 0.0
    %256 = vmatpush.msra.mxu0 0.0
    %257 = vmatpush.msra.mxu0 0.0
    %258 = vmatpush.msra.mxu0 %v243
    %259 = vmatpush.msra.mxu0 %v242
    %260 = vmatmul.f32.gmra.mxu0 %v118
    %v261 = vpop.f32.mrf.mxu0
    %v262 = vadd.f32 0.0, %v261
    %263 = vdwg.mxu0
    %v265 = vsel %vm140, %v234, 0
    %267 = vmatpush.msra.mxu0 0.0
    %268 = vmatpush.msra.mxu0 0.0
    %269 = vmatpush.msra.mxu0 0.0
    %270 = vmatpush.msra.mxu0 0.0
    %271 = vmatpush.msra.mxu0 0.0
    %272 = vmatpush.msra.mxu0 0.0
    %273 = vmatpush.msra.mxu0 0.0
    %274 = vmatpush.msra.mxu0 0.0
    %275 = vmatpush.msra.mxu0 0.0
    %276 = vmatpush.msra.mxu0 0.0
    %277 = vmatpush.msra.mxu0 0.0
    %278 = vmatpush.msra.mxu0 0.0
    %279 = vmatpush.msra.mxu0 0.0
    %280 = vmatpush.msra.mxu0 0.0
    %281 = vmatpush.msra.mxu0 0.0
    %282 = vmatpush.msra.mxu0 %v240
    %283 = vmatmul.f32.gmra.mxu0 %v265
    %v284 = vpop.f32.mrf.mxu0
    %v285 = vadd.f32 %v262, %v284
    %286 = vdwg.mxu0
    %s287 = scalar_lea.vmem %s4, 1
    %v288 = vld [vmem:[%s287] sm:$0x1]
    %v290 = vperm.slane %v288, 0
    %v292 = vadd.f32 %v285, %v290
    %v293 = vtanh.pop %v292
    %s294 = scalar_lea.vmem [#allocation8], 32
    %v295 = vld [vmem:[%s294] sm:$0xff]
    %v296 = vld [vmem:[%s294 + $0x8] sm:$0xff]
    %v297 = vld [vmem:[%s294 + $0x10] sm:$0xff]
    %v298 = vld [vmem:[%s294 + $0x18] sm:$0xff]
    %s299 = scalar_lea.vmem %s7, 1
    %v300 = vld [vmem:[%s299] sm:$0x1]
    %v302 = vperm.slane %v300, 0
    %v305 = vsel %vm178, %v293, 0
    %307 = vmatpush.msra.mxu0 0.0
    %308 = vmatpush.msra.mxu0 0.0
    %309 = vmatpush.msra.mxu0 0.0
    %310 = vmatpush.msra.mxu0 0.0
    %311 = vmatpush.msra.mxu0 0.0
    %312 = vmatpush.msra.mxu0 0.0
    %313 = vmatpush.msra.mxu0 0.0
    %314 = vmatpush.msra.mxu0 0.0
    %315 = vmatpush.msra.mxu0 0.0
    %316 = vmatpush.msra.mxu0 0.0
    %317 = vmatpush.msra.mxu0 0.0
    %318 = vmatpush.msra.mxu0 0.0
    %319 = vmatpush.msra.mxu0 %v298
    %320 = vmatpush.msra.mxu0 %v297
    %321 = vmatpush.msra.mxu0 %v296
    %322 = vmatpush.msra.mxu0 %v295
    %323 = vmatmul.f32.gmra.mxu0 %v305
    %v324 = vpop.f32.mrf.mxu0
    %v325 = vadd.f32 %v302, %v324
    %326 = vdwg.mxu0
    %v327 = vtanh.pop %v325
    %s328 = scalar_lea.vmem [#allocation10], 32
    %v329 = vld [vmem:[%s328] sm:$0xff]
    %v330 = vld [vmem:[%s328 + $0x8] sm:$0xff]
    %v331 = vld [vmem:[%s328 + $0x10] sm:$0xff]
    %v332 = vld [vmem:[%s328 + $0x18] sm:$0xff]
    %s333 = scalar_lea.vmem %s8, 1
    %v334 = vld [vmem:[%s333] sm:$0x1]
    %v336 = vperm.slane %v334, 0
    %338 = vmatpush.msra.mxu0 0.0
    %339 = vmatpush.msra.mxu0 0.0
    %340 = vmatpush.msra.mxu0 0.0
    %341 = vmatpush.msra.mxu0 0.0
    %342 = vmatpush.msra.mxu0 0.0
    %343 = vmatpush.msra.mxu0 0.0
    %344 = vmatpush.msra.mxu0 0.0
    %345 = vmatpush.msra.mxu0 0.0
    %346 = vmatpush.msra.mxu0 0.0
    %347 = vmatpush.msra.mxu0 0.0
    %348 = vmatpush.msra.mxu0 0.0
    %349 = vmatpush.msra.mxu0 0.0
    %350 = vmatpush.msra.mxu0 %v332
    %351 = vmatpush.msra.mxu0 %v331
    %352 = vmatpush.msra.mxu0 %v330
    %353 = vmatpush.msra.mxu0 %v329
    %354 = vmatmul.f32.gmra.mxu0 %v305
    %v355 = vpop.f32.mrf.mxu0
    %v356 = vadd.f32 %v336, %v355
    %357 = vdwg.mxu0
    %v358 = vmul.f32 %v327, 1.442695
    %v359 = vpow.pop %v358
    %v360 = vmul.f32 %v234, %v359
    %v361 = vadd.f32 %v360, %v356
    %v362 = vsel %vm140, %v327, 0.0
    %363 = vadd.xlane.f32.xlu0 %v362
    %v364 = vpop.xlane.xlu0 %363
    %v365 = vadd.f32 %v238, %v364
    %s366 = scalar_lea.vmem [#allocation5], 16
    %v367 = vld [vmem:[%s366] sm:$0xff]
    %s368 = scalar_lea.vmem [#allocation7], 32
    %v369 = vld [vmem:[%s368] sm:$0xff]
    %v370 = vld [vmem:[%s368 + $0x8] sm:$0xff]
    %371 = vmatpush.msra.mxu0 0.0
    %372 = vmatpush.msra.mxu0 0.0
    %373 = vmatpush.msra.mxu0 0.0
    %374 = vmatpush.msra.mxu0 0.0
    %375 = vmatpush.msra.mxu0 0.0
    %376 = vmatpush.msra.mxu0 0.0
    %377 = vmatpush.msra.mxu0 0.0
    %378 = vmatpush.msra.mxu0 0.0
    %379 = vmatpush.msra.mxu0 0.0
    %380 = vmatpush.msra.mxu0 0.0
    %381 = vmatpush.msra.mxu0 0.0
    %382 = vmatpush.msra.mxu0 0.0
    %383 = vmatpush.msra.mxu0 0.0
    %384 = vmatpush.msra.mxu0 0.0
    %385 = vmatpush.msra.mxu0 %v370
    %386 = vmatpush.msra.mxu0 %v369
    %387 = vmatmul.f32.gmra.mxu0 %v118
    %v388 = vpop.f32.mrf.mxu0
    %v389 = vadd.f32 0.0, %v388
    %390 = vdwg.mxu0
    %v392 = vsel %vm140, %v361, 0
    %394 = vmatpush.msra.mxu0 0.0
    %395 = vmatpush.msra.mxu0 0.0
    %396 = vmatpush.msra.mxu0 0.0
    %397 = vmatpush.msra.mxu0 0.0
    %398 = vmatpush.msra.mxu0 0.0
    %399 = vmatpush.msra.mxu0 0.0
    %400 = vmatpush.msra.mxu0 0.0
    %401 = vmatpush.msra.mxu0 0.0
    %402 = vmatpush.msra.mxu0 0.0
    %403 = vmatpush.msra.mxu0 0.0
    %404 = vmatpush.msra.mxu0 0.0
    %405 = vmatpush.msra.mxu0 0.0
    %406 = vmatpush.msra.mxu0 0.0
    %407 = vmatpush.msra.mxu0 0.0
    %408 = vmatpush.msra.mxu0 0.0
    %409 = vmatpush.msra.mxu0 %v367
    %410 = vmatmul.f32.gmra.mxu0 %v392
    %v411 = vpop.f32.mrf.mxu0
    %v412 = vadd.f32 %v389, %v411
    %413 = vdwg.mxu0
    %s414 = scalar_lea.vmem %s4, 2
    %v415 = vld [vmem:[%s414] sm:$0x1]
    %v417 = vperm.slane %v415, 0
    %v419 = vadd.f32 %v412, %v417
    %v420 = vtanh.pop %v419
    %s421 = scalar_lea.vmem [#allocation8], 64
    %v422 = vld [vmem:[%s421] sm:$0xff]
    %v423 = vld [vmem:[%s421 + $0x8] sm:$0xff]
    %v424 = vld [vmem:[%s421 + $0x10] sm:$0xff]
    %v425 = vld [vmem:[%s421 + $0x18] sm:$0xff]
    %s426 = scalar_lea.vmem %s7, 2
    %v427 = vld [vmem:[%s426] sm:$0x1]
    %v429 = vperm.slane %v427, 0
    %v432 = vsel %vm178, %v420, 0
    %434 = vmatpush.msra.mxu0 0.0
    %435 = vmatpush.msra.mxu0 0.0
    %436 = vmatpush.msra.mxu0 0.0
    %437 = vmatpush.msra.mxu0 0.0
    %438 = vmatpush.msra.mxu0 0.0
    %439 = vmatpush.msra.mxu0 0.0
    %440 = vmatpush.msra.mxu0 0.0
    %441 = vmatpush.msra.mxu0 0.0
    %442 = vmatpush.msra.mxu0 0.0
    %443 = vmatpush.msra.mxu0 0.0
    %444 = vmatpush.msra.mxu0 0.0
    %445 = vmatpush.msra.mxu0 0.0
    %446 = vmatpush.msra.mxu0 %v425
    %447 = vmatpush.msra.mxu0 %v424
    %448 = vmatpush.msra.mxu0 %v423
    %449 = vmatpush.msra.mxu0 %v422
    %450 = vmatmul.f32.gmra.mxu0 %v432
    %v451 = vpop.f32.mrf.mxu0
    %v452 = vadd.f32 %v429, %v451
    %453 = vdwg.mxu0
    %v454 = vtanh.pop %v452
    %s455 = scalar_lea.vmem [#allocation10], 64
    %v456 = vld [vmem:[%s455] sm:$0xff]
    %v457 = vld [vmem:[%s455 + $0x8] sm:$0xff]
    %v458 = vld [vmem:[%s455 + $0x10] sm:$0xff]
    %v459 = vld [vmem:[%s455 + $0x18] sm:$0xff]
    %s460 = scalar_lea.vmem %s8, 2
    %v461 = vld [vmem:[%s460] sm:$0x1]
    %v463 = vperm.slane %v461, 0
    %465 = vmatpush.msra.mxu0 0.0
    %466 = vmatpush.msra.mxu0 0.0
    %467 = vmatpush.msra.mxu0 0.0
    %468 = vmatpush.msra.mxu0 0.0
    %469 = vmatpush.msra.mxu0 0.0
    %470 = vmatpush.msra.mxu0 0.0
    %471 = vmatpush.msra.mxu0 0.0
    %472 = vmatpush.msra.mxu0 0.0
    %473 = vmatpush.msra.mxu0 0.0
    %474 = vmatpush.msra.mxu0 0.0
    %475 = vmatpush.msra.mxu0 0.0
    %476 = vmatpush.msra.mxu0 0.0
    %477 = vmatpush.msra.mxu0 %v459
    %478 = vmatpush.msra.mxu0 %v458
    %479 = vmatpush.msra.mxu0 %v457
    %480 = vmatpush.msra.mxu0 %v456
    %481 = vmatmul.f32.gmra.mxu0 %v432
    %v482 = vpop.f32.mrf.mxu0
    %v483 = vadd.f32 %v463, %v482
    %484 = vdwg.mxu0
    %v485 = vmul.f32 %v454, 1.442695
    %v486 = vpow.pop %v485
    %v487 = vmul.f32 %v361, %v486
    %v488 = vadd.f32 %v487, %v483
    %v489 = vsel %vm140, %v454, 0.0
    %490 = vadd.xlane.f32.xlu0 %v489
    %v491 = vpop.xlane.xlu0 %490
    %v492 = vadd.f32 %v365, %v491
    %493 = vst.msk [vmem:[#allocation11] sm:$0xff] %vm140, %v488
    %vm494 = vcmask 7168
    %495 = vst.msk [vmem:[%s10] sm:$0xff] %vm494, %v492
    // Predicated region
    $region58: #{_forward_impl.1} parent=1 // pred_check
      _
    $region59: #{_forward_impl.1} parent=1 // pred_check_branch
      %497 = sbr.rel (0) target = $region61
    $region60: #{_forward_impl.1} parent=1 // pred_region
      %499 = vsyncadd [#allocation4], 0
      %s501 = sshll.u32 [#allocation11], 4
      %s502 = int_to_ptr.vmem [resolvable:$true] %s501
      %s503 = sshll.u32 %s9, 4
      %s504 = int_to_ptr.hbm [resolvable:$true] %s503
      %506 = dma.vmem_to_hbm [thread:$0]  %s502, 128, %s504, [#allocation4]
    $region61: #{_forward_impl.1} parent=1 // pred_fallthru
      _
    // Predicated region
    $region62: #{_forward_impl.1} parent=1 // pred_check
      _
    $region63: #{_forward_impl.1} parent=1 // pred_check_branch
      %508 = sbr.rel (0) target = $region65
    $region64: #{_forward_impl.1} parent=1 // pred_region
      _
    $region65: #{_forward_impl.1} parent=1 // pred_fallthru
      _
    // Predicated region
    $region66: #{_forward_impl.1} parent=1 // pred_check
      _
    $region67: #{_forward_impl.1} parent=1 // pred_check_branch
      %510 = sbr.rel (0) target = $region69
    $region68: #{_forward_impl.1} parent=1 // pred_region
      %512 = dma.done [#allocation4], 128
    $region69: #{_forward_impl.1} parent=1 // pred_fallthru
      _
    // Predicated region
    $region70: #{_forward_impl.1} parent=1 // pred_check
      _
    $region71: #{_forward_impl.1} parent=1 // pred_check_branch
      %514 = sbr.rel (0) target = $region73
    $region72: #{_forward_impl.1} parent=1 // pred_region
      _
    $region73: #{_forward_impl.1} parent=1 // pred_fallthru
      _
    %515 = vsyncpa [#allocation3], 1
    %516 = vsyncpa [#allocation6], 1
    %517 = vsyncpa [#allocation9], 1
    %518 = vsyncpa [#allocation4], 1

</llo_original>
